<compile_context>
chip_gen: v7x
topology: tpu7x:2x2x1
jax: 0.10.0
libtpu: 0.0.40
codegen_flags: <defaults>
</compile_context>

<pallas_src>
import functools

import jax
import jax.numpy as jnp
from jax.experimental import pallas as pl
from jax.experimental.pallas import tpu as pltpu


def _fused_generator_kernel(xcol_ref, mask_ref, w1_ref, b1_ref, w2_ref, b2_ref,
                            o_ref, *, H, W):
    """Fused conv3x3+ReLU -> conv3x3+tanh for one image, channel-first / lane-dense.

    xcol_ref: (1, 9*Cin, HE*WE)  im2col of padded input over the extended grid
    mask_ref: (1, HE*WE)         1.0 on the HxW interior of the extended grid, else 0
    w1_ref  : (Cmid, 9*Cin)
    b1_ref  : (Cmid, 1)
    w2_ref  : (Cout, 9*Cmid)
    b2_ref  : (Cout, 1)
    o_ref   : (1, Cout, HE*WE)   conv2 output over the extended grid (wrapper slices interior)
    """
    HE, WE = H + 2, W + 2
    HEWE = HE * WE
    PAD = WE + 1
    Cmid = w1_ref.shape[0]

    # ---- conv1: ONE K=9*Cin MXU matmul, channel-first (Cmid, HEWE) accumulator ----
    h = jax.lax.dot_general(
        w1_ref[...], xcol_ref[0],
        dimension_numbers=(((1,), (0,)), ((), ())),
        preferred_element_type=jnp.float32)                      # (Cmid, HEWE)
    # bias + ReLU + zero the 1-pixel pad ring (== SAME zero-padding of conv1 output)
    h = jnp.maximum(h + b1_ref[...], 0.0) * mask_ref[...]

    # ---- flatten with zero margins so every 3x3 tap is a static lane-offset slice ----
    zpad = jnp.zeros((Cmid, PAD), jnp.float32)
    hflat = jnp.concatenate([zpad, h, zpad], axis=1)             # (Cmid, HEWE + 2*PAD)

    # ---- conv2: stack 9 lane-shifted taps -> ONE K=9*Cmid MXU matmul ----
    taps = [hflat[:, dh * WE + dw: dh * WE + dw + HEWE]
            for dh in range(3) for dw in range(3)]
    hcol = jnp.concatenate(taps, axis=0)                         # (9*Cmid, HEWE)
    y = jax.lax.dot_general(
        w2_ref[...], hcol,
        dimension_numbers=(((1,), (0,)), ((), ())),
        preferred_element_type=jnp.float32)                      # (Cout, HEWE)
    o_ref[0] = jnp.tanh(y + b2_ref[...]).astype(o_ref.dtype)
    # TODO(synk): on v6e/v7x at realistic sizes cast matmul operands to bf16
    #             (keep f32 accumulation / f32 elementwise for v5e's VPU).


def _prep_params(params):
    w1, b1, w2, b2 = params["w1"], params["b1"], params["w2"], params["b2"]
    Cin, Cmid = w1.shape[2], w1.shape[3]
    Cout = w2.shape[3]
    w1m = w1.reshape(9 * Cin, Cmid).T          # (Cmid, 9*Cin): [cmid, t*Cin+cin]
    b1m = b1.reshape(Cmid, 1)
    w2m = w2.reshape(9 * Cmid, Cout).T         # (Cout, 9*Cmid): [cout, t*Cmid+c]
    b2m = b2.reshape(Cout, 1)
    return w1m, b1m, w2m, b2m


def generator_forward(params, x_nchw):
    """Generator.forward(x) == self.generator(x). NCHW in/out like PyTorch."""
    N, Cin, H, W = x_nchw.shape
    Cmid = params["w1"].shape[3]
    Cout = params["w2"].shape[3]
    HE, WE = H + 2, W + 2                      # exact extended grid (no pow-2 blow-up)
    HEWE = HE * WE

    # conv1 im2col over the extended grid, channel-first / lane-dense (tiny: done in XLA).
    x_pad = jnp.pad(x_nchw, ((0, 0), (0, 0), (2, 2), (2, 2)))    # (N, Cin, H+4, W+4)
    taps = [x_pad[:, :, dh:dh + HE, dw:dw + WE]
            for dh in range(3) for dw in range(3)]
    xcol = jnp.stack(taps, axis=1).reshape(N, 9 * Cin, HEWE)     # rows = t*Cin + cin

    # Interior mask of the extended grid (built once in the wrapper; no in-kernel decode).
    a = jnp.arange(HE)
    b = jnp.arange(WE)
    m2d = ((a >= 1) & (a <= H))[:, None] & ((b >= 1) & (b <= W))[None, :]
    mask = m2d.astype(jnp.float32).reshape(1, HEWE)

    w1m, b1m, w2m, b2m = _prep_params(params)

    out_ext = pl.pallas_call(
        functools.partial(_fused_generator_kernel, H=H, W=W),
        out_shape=jax.ShapeDtypeStruct((N, Cout, HEWE), x_nchw.dtype),
        grid=(N,),
        in_specs=[
            pl.BlockSpec((1, 9 * Cin, HEWE), lambda n: (n, 0, 0)),
            pl.BlockSpec((1, HEWE), lambda n: (0, 0)),
            pl.BlockSpec((Cmid, 9 * Cin), lambda n: (0, 0)),
            pl.BlockSpec((Cmid, 1), lambda n: (0, 0)),
            pl.BlockSpec((Cout, 9 * Cmid), lambda n: (0, 0)),
            pl.BlockSpec((Cout, 1), lambda n: (0, 0)),
        ],
        out_specs=pl.BlockSpec((1, Cout, HEWE), lambda n: (n, 0, 0)),
        compiler_params=pltpu.CompilerParams(dimension_semantics=("parallel",)),
    )(xcol, mask, w1m, b1m, w2m, b2m)

    # Extended grid -> interior HxW, already NCHW.
    return out_ext.reshape(N, Cout, HE, WE)[:, :, 1:1 + H, 1:1 + W]


def init_generator_params(key, c_in=4, c_mid=8, c_out=3):
    """Deterministic PyTorch-default-style (kaiming-uniform-ish) init."""
    k1, k2, k3, k4 = jax.random.split(key, 4)

    def uinit(k, shape, fan_in):
        bound = 1.0 / jnp.sqrt(float(fan_in))
        return jax.random.uniform(k, shape, jnp.float32, -bound, bound)

    return {
        "w1": uinit(k1, (3, 3, c_in, c_mid), 9 * c_in),   # HWIO
        "b1": uinit(k2, (c_mid,), 9 * c_in),
        "w2": uinit(k3, (3, 3, c_mid, c_out), 9 * c_mid),
        "b2": uinit(k4, (c_out,), 9 * c_mid),
    }


def _reference_forward(params, x_nchw):
    """Pure-JAX reference for correctness check."""
    x = jnp.transpose(x_nchw, (0, 2, 3, 1))
    h = jax.lax.conv_general_dilated(
        x, params["w1"], (1, 1), "SAME",
        dimension_numbers=("NHWC", "HWIO", "NHWC")) + params["b1"]
    h = jnp.maximum(h, 0.0)
    y = jax.lax.conv_general_dilated(
        h, params["w2"], (1, 1), "SAME",
        dimension_numbers=("NHWC", "HWIO", "NHWC")) + params["b2"]
    y = jnp.tanh(y)
    return jnp.transpose(y, (0, 3, 1, 2))


if __name__ == "__main__":
    key = jax.random.PRNGKey(0)
    kx, kp = jax.random.split(key)

    # PyTorch-style NCHW input: batch=2, channels=4, spatial=16x16
    x = jax.random.normal(kx, (2, 4, 16, 16), jnp.float32)
    params = init_generator_params(kp)

    out = jax.jit(generator_forward)(params, x)
    out = jax.block_until_ready(out)

    ref = _reference_forward(params, x)
    assert out.shape == (2, 3, 16, 16), out.shape
    err = float(jnp.max(jnp.abs(out - ref)))
    assert jnp.allclose(out, ref, atol=1e-4, rtol=1e-4), err

    print("KERNEL_OK")
</pallas_src>

<mosaic_0001>
module attributes {stable_mosaic.version = 11 : i64} {
  func.func @_fused_generator_kernel(%arg0: i32, %arg1: memref<1x36x324xf32, #tpu.memory_space<vmem>>, %arg2: memref<1x324xf32, #tpu.memory_space<vmem>>, %arg3: memref<8x36xf32, #tpu.memory_space<vmem>>, %arg4: memref<8x1xf32, #tpu.memory_space<vmem>>, %arg5: memref<3x72xf32, #tpu.memory_space<vmem>>, %arg6: memref<3x1xf32, #tpu.memory_space<vmem>>, %arg7: memref<1x3x324xf32, #tpu.memory_space<vmem>>) attributes {dimension_semantics = [#tpu.dimension_semantics<parallel>], iteration_bounds = array<i64: 2>, scalar_prefetch = 0 : i64, scratch_operands = 0 : i64, tpu.core_type = #tpu.core_type<tc>, window_params = [{transform_indices = @transform_0, window_bounds = array<i64: 1, 36, 324>}, {pipeline_mode = #tpu.pipeline_mode<synchronous>, transform_indices = @transform_1, window_bounds = array<i64: 1, 324>}, {pipeline_mode = #tpu.pipeline_mode<synchronous>, transform_indices = @transform_2, window_bounds = array<i64: 8, 36>}, {pipeline_mode = #tpu.pipeline_mode<synchronous>, transform_indices = @transform_3, window_bounds = array<i64: 8, 1>}, {pipeline_mode = #tpu.pipeline_mode<synchronous>, transform_indices = @transform_4, window_bounds = array<i64: 3, 72>}, {pipeline_mode = #tpu.pipeline_mode<synchronous>, transform_indices = @transform_5, window_bounds = array<i64: 3, 1>}, {transform_indices = @transform_6, window_bounds = array<i64: 1, 3, 324>}]} {
    %c0 = arith.constant 0 : index
    %c0_0 = arith.constant 0 : index
    %0 = vector.load %arg3[%c0, %c0_0] : memref<8x36xf32, #tpu.memory_space<vmem>>, vector<8x36xf32>
    %c0_1 = arith.constant 0 : index
    %c0_2 = arith.constant 0 : index
    %c0_3 = arith.constant 0 : index
    %1 = vector.load %arg1[%c0_1, %c0_2, %c0_3] : memref<1x36x324xf32, #tpu.memory_space<vmem>>, vector<1x36x324xf32>
    %2 = vector.shape_cast %1 : vector<1x36x324xf32> to vector<36x324xf32>
    %cst = arith.constant dense<0.000000e+00> : vector<8x324xf32>
    %3 = tpu.matmul %0, %2, %cst {dimension_numbers = #tpu.dot_dimension_numbers<[1], [0], [0], [1], [0, 0, 1, 1], [], []>} : vector<8x36xf32>, vector<36x324xf32>, vector<8x324xf32> -> vector<8x324xf32>
    %c0_4 = arith.constant 0 : index
    %c0_5 = arith.constant 0 : index
    %4 = vector.load %arg4[%c0_4, %c0_5] : memref<8x1xf32, #tpu.memory_space<vmem>>, vector<8x1xf32>
    %5 = vector.broadcast %4 : vector<8x1xf32> to vector<8x324xf32>
    %6 = arith.addf %3, %5 : vector<8x324xf32>
    %cst_6 = arith.constant 0.000000e+00 : f32
    %7 = vector.broadcast %cst_6 : f32 to vector<8x324xf32>
    %8 = arith.maximumf %6, %7 : vector<8x324xf32>
    %c0_7 = arith.constant 0 : index
    %c0_8 = arith.constant 0 : index
    %9 = vector.load %arg2[%c0_7, %c0_8] : memref<1x324xf32, #tpu.memory_space<vmem>>, vector<1x324xf32>
    %10 = vector.broadcast %9 : vector<1x324xf32> to vector<8x324xf32>
    %11 = arith.mulf %8, %10 : vector<8x324xf32>
    %cst_9 = arith.constant 0.000000e+00 : f32
    %12 = vector.broadcast %cst_9 : f32 to vector<8x19xf32>
    %13 = tpu.concatenate %12, %11, %12 in 1 : vector<8x19xf32>, vector<8x324xf32>, vector<8x19xf32> -> vector<8x362xf32>
    %14 = vector.extract_strided_slice %13 {offsets = [0, 0], sizes = [8, 324], strides = [1, 1]} : vector<8x362xf32> to vector<8x324xf32>
    %15 = vector.extract_strided_slice %13 {offsets = [0, 1], sizes = [8, 324], strides = [1, 1]} : vector<8x362xf32> to vector<8x324xf32>
    %16 = vector.extract_strided_slice %13 {offsets = [0, 2], sizes = [8, 324], strides = [1, 1]} : vector<8x362xf32> to vector<8x324xf32>
    %17 = vector.extract_strided_slice %13 {offsets = [0, 18], sizes = [8, 324], strides = [1, 1]} : vector<8x362xf32> to vector<8x324xf32>
    %18 = vector.extract_strided_slice %13 {offsets = [0, 19], sizes = [8, 324], strides = [1, 1]} : vector<8x362xf32> to vector<8x324xf32>
    %19 = vector.extract_strided_slice %13 {offsets = [0, 20], sizes = [8, 324], strides = [1, 1]} : vector<8x362xf32> to vector<8x324xf32>
    %20 = vector.extract_strided_slice %13 {offsets = [0, 36], sizes = [8, 324], strides = [1, 1]} : vector<8x362xf32> to vector<8x324xf32>
    %21 = vector.extract_strided_slice %13 {offsets = [0, 37], sizes = [8, 324], strides = [1, 1]} : vector<8x362xf32> to vector<8x324xf32>
    %22 = vector.extract_strided_slice %13 {offsets = [0, 38], sizes = [8, 324], strides = [1, 1]} : vector<8x362xf32> to vector<8x324xf32>
    %23 = tpu.concatenate %14, %15, %16, %17, %18, %19, %20, %21, %22 in 0 : vector<8x324xf32>, vector<8x324xf32>, vector<8x324xf32>, vector<8x324xf32>, vector<8x324xf32>, vector<8x324xf32>, vector<8x324xf32>, vector<8x324xf32>, vector<8x324xf32> -> vector<72x324xf32>
    %c0_10 = arith.constant 0 : index
    %c0_11 = arith.constant 0 : index
    %24 = vector.load %arg5[%c0_10, %c0_11] : memref<3x72xf32, #tpu.memory_space<vmem>>, vector<3x72xf32>
    %cst_12 = arith.constant dense<0.000000e+00> : vector<3x324xf32>
    %25 = tpu.matmul %24, %23, %cst_12 {dimension_numbers = #tpu.dot_dimension_numbers<[1], [0], [0], [1], [0, 0, 1, 1], [], []>} : vector<3x72xf32>, vector<72x324xf32>, vector<3x324xf32> -> vector<3x324xf32>
    %c0_13 = arith.constant 0 : index
    %c0_14 = arith.constant 0 : index
    %26 = vector.load %arg6[%c0_13, %c0_14] : memref<3x1xf32, #tpu.memory_space<vmem>>, vector<3x1xf32>
    %27 = vector.broadcast %26 : vector<3x1xf32> to vector<3x324xf32>
    %28 = arith.addf %25, %27 : vector<3x324xf32>
    %29 = math.tanh %28 : vector<3x324xf32>
    %c0_15 = arith.constant 0 : index
    %c0_16 = arith.constant 0 : index
    %c0_17 = arith.constant 0 : index
    %30 = vector.load %arg7[%c0_15, %c0_16, %c0_17] : memref<1x3x324xf32, #tpu.memory_space<vmem>>, vector<1x3x324xf32>
    %31 = vector.shape_cast %30 : vector<1x3x324xf32> to vector<3x324xf32>
    %32 = vector.shape_cast %29 : vector<3x324xf32> to vector<1x3x324xf32>
    tpu.vector_store %arg7[%c0_15, %c0_16, %c0_17], %32 {strides = array<i32>} : memref<1x3x324xf32, #tpu.memory_space<vmem>>, vector<1x3x324xf32>,
    return
  }
  func.func @transform_0(%arg0: i32) -> (i32, i32, i32) {
    %c0_i32 = arith.constant 0 : i32
    %c0_i32_0 = arith.constant 0 : i32
    %c0_i32_1 = arith.constant 0 : i32
    return %arg0, %c0_i32, %c0_i32_0 : i32, i32, i32
  }
  func.func @transform_1(%arg0: i32) -> (i32, i32) {
    %c0_i32 = arith.constant 0 : i32
    %c0_i32_0 = arith.constant 0 : i32
    %c0_i32_1 = arith.constant 0 : i32
    return %c0_i32, %c0_i32_0 : i32, i32
  }
  func.func @transform_2(%arg0: i32) -> (i32, i32) {
    %c0_i32 = arith.constant 0 : i32
    %c0_i32_0 = arith.constant 0 : i32
    %c0_i32_1 = arith.constant 0 : i32
    return %c0_i32, %c0_i32_0 : i32, i32
  }
  func.func @transform_3(%arg0: i32) -> (i32, i32) {
    %c0_i32 = arith.constant 0 : i32
    %c0_i32_0 = arith.constant 0 : i32
    %c0_i32_1 = arith.constant 0 : i32
    return %c0_i32, %c0_i32_0 : i32, i32
  }
  func.func @transform_4(%arg0: i32) -> (i32, i32) {
    %c0_i32 = arith.constant 0 : i32
    %c0_i32_0 = arith.constant 0 : i32
    %c0_i32_1 = arith.constant 0 : i32
    return %c0_i32, %c0_i32_0 : i32, i32
  }
  func.func @transform_5(%arg0: i32) -> (i32, i32) {
    %c0_i32 = arith.constant 0 : i32
    %c0_i32_0 = arith.constant 0 : i32
    %c0_i32_1 = arith.constant 0 : i32
    return %c0_i32, %c0_i32_0 : i32, i32
  }
  func.func @transform_6(%arg0: i32) -> (i32, i32, i32) {
    %c0_i32 = arith.constant 0 : i32
    %c0_i32_0 = arith.constant 0 : i32
    %c0_i32_1 = arith.constant 0 : i32
    return %arg0, %c0_i32, %c0_i32_0 : i32, i32, i32
  }
}

</mosaic_0001>

<llo_original>
// kernel: generator_forward.1
$region0: #{generator_forward.1}
  #allocation0 [shape = 'u32[]', space=smem, size = 0x4, offset = 0x4, fixed_abs, tag = 'smem constant byte address 0x4 - core index']
  #allocation1 [shape = 'u32[144,128]{1,0:T(1,128)}', space=vmem, size = 0x12000, scoped, tag = 'internal scratch']
  %s0 = inlined_call_operand.vmem [shape: f32[2,36,324], index: 0, kind: input, shape index: {}]
  %s1 = inlined_call_operand.vmem [shape: f32[1,324], index: 1, kind: input, shape index: {}]
  %s2 = inlined_call_operand.vmem [shape: f32[8,36], index: 2, kind: input, shape index: {}]
  %s3 = inlined_call_operand.vmem [shape: f32[8,1], index: 3, kind: input, shape index: {}]
  %s4 = inlined_call_operand.vmem [shape: f32[3,72], index: 4, kind: input, shape index: {}]
  %s5 = inlined_call_operand.vmem [shape: f32[3,1], index: 5, kind: input, shape index: {}]
  %s6 = inlined_call_operand.vmem [shape: f32[2,3,324], index: 6, kind: output, shape index: {}]
  %s7 = sld [smem:[#allocation0]]
  $region57: #{generator_forward.1} parent=0
    _
  %s9 = ssub.s32 1, %s7
  %s10 = scalar_select 0, %s9, %s7
  loop: start=0, step=1, limit=4
  $region2: #{generator_forward.1} parent=0 // loop_pre_header
    _
  $region3: #{generator_forward.1} parent=0 // loop_header
    %s12 = sphi 0, %s16
    %p13 = scmp.ge.s32.totalorder %s12, 4
    %s22 = sphi 0, %s24
    %s25 = sphi 0, %s22
    %s26 = sphi 0, %s25
    %s42 = sphi 0, %s26
    %s46 = sphi 0, %s46
    %s48 = sphi 0, %s46
    %s49 = sphi 0, %s48
    %s63 = sphi 0, %s49
    %s67 = sphi 0, %s67
    %s69 = sphi 0, %s67
    %s70 = sphi 0, %s69
    %s84 = sphi 0, %s70
    %s88 = sphi 0, %s88
    %s90 = sphi 0, %s88
    %s91 = sphi 0, %s90
    %s105 = sphi 0, %s91
    %s109 = sphi 0, %s109
    %s111 = sphi 0, %s109
    %s112 = sphi 0, %s111
    %s126 = sphi 0, %s112
    %s130 = sphi 0, %s130
    %s132 = sphi 0, %s130
    %s133 = sphi 0, %s132
    %s147 = sphi 0, %s133
    %s153 = sphi 0, %s155
    %s156 = sphi 0, %s153
    %s157 = sphi 0, %s156
    %s173 = sphi 0, %s157
  $region4: #{generator_forward.1} parent=0 // loop_header_branch
    %15 = sbr.rel (%p13) target = $region8
  $region5: #{generator_forward.1} parent=0 // loop_body
    %s17 = ssub.s32 %s12, 1
    %s18 = ssub.s32 %s12, 2
    %s19 = sadd.s32 %s12, 1
    %s20 = ssub.s32 %s12, %s19
    %p21 = scmp.eq.s32.totalorder %s20, 0
    %s23 = sadd.s32 %s22, 1
    %s24 = scalar_select %p21, %s22, %s23
    %p27 = pneg %p21
    %p28 = scmp.eq.s32.totalorder %s12, 1
    %p29 = por %p27, %p28
    %p30 = scmp.ne.s32.totalorder %s22, %s25
    %p31 = scmp.eq.s32.totalorder %s12, 0
    %p32 = por %p30, %p31
    %p33 = scmp.ne.s32.totalorder %s22, %s25
    %p34 = scmp.eq.s32.totalorder %s17, 1
    %p35 = por %p33, %p34
    %p36 = scmp.ne.s32.totalorder %s25, %s26
    %p37 = scmp.eq.s32.totalorder %s17, 0
    %p38 = por %p36, %p37
    %p39 = scmp.ne.s32.totalorder %s25, %s26
    %p40 = scmp.eq.s32.totalorder %s18, 1
    %p41 = por %p39, %p40
    %p43 = scmp.ne.s32.totalorder %s26, %s42
    %p44 = scmp.eq.s32.totalorder %s18, 0
    %p45 = por %p43, %p44
    %s47 = sadd.s32 %s46, 1
    %p50 = scmp.eq.s32.totalorder %s12, 1
    %p51 = scmp.ne.s32.totalorder %s46, %s48
    %p52 = scmp.eq.s32.totalorder %s12, 0
    %p53 = por %p51, %p52
    %p54 = scmp.ne.s32.totalorder %s46, %s48
    %p55 = scmp.eq.s32.totalorder %s17, 1
    %p56 = por %p54, %p55
    %p57 = scmp.ne.s32.totalorder %s48, %s49
    %p58 = scmp.eq.s32.totalorder %s17, 0
    %p59 = por %p57, %p58
    %p60 = scmp.ne.s32.totalorder %s48, %s49
    %p61 = scmp.eq.s32.totalorder %s18, 1
    %p62 = por %p60, %p61
    %p64 = scmp.ne.s32.totalorder %s49, %s63
    %p65 = scmp.eq.s32.totalorder %s18, 0
    %p66 = por %p64, %p65
    %s68 = sadd.s32 %s67, 1
    %p71 = scmp.eq.s32.totalorder %s12, 1
    %p72 = scmp.ne.s32.totalorder %s67, %s69
    %p73 = scmp.eq.s32.totalorder %s12, 0
    %p74 = por %p72, %p73
    %p75 = scmp.ne.s32.totalorder %s67, %s69
    %p76 = scmp.eq.s32.totalorder %s17, 1
    %p77 = por %p75, %p76
    %p78 = scmp.ne.s32.totalorder %s69, %s70
    %p79 = scmp.eq.s32.totalorder %s17, 0
    %p80 = por %p78, %p79
    %p81 = scmp.ne.s32.totalorder %s69, %s70
    %p82 = scmp.eq.s32.totalorder %s18, 1
    %p83 = por %p81, %p82
    %p85 = scmp.ne.s32.totalorder %s70, %s84
    %p86 = scmp.eq.s32.totalorder %s18, 0
    %p87 = por %p85, %p86
    %s89 = sadd.s32 %s88, 1
    %p92 = scmp.eq.s32.totalorder %s12, 1
    %p93 = scmp.ne.s32.totalorder %s88, %s90
    %p94 = scmp.eq.s32.totalorder %s12, 0
    %p95 = por %p93, %p94
    %p96 = scmp.ne.s32.totalorder %s88, %s90
    %p97 = scmp.eq.s32.totalorder %s17, 1
    %p98 = por %p96, %p97
    %p99 = scmp.ne.s32.totalorder %s90, %s91
    %p100 = scmp.eq.s32.totalorder %s17, 0
    %p101 = por %p99, %p100
    %p102 = scmp.ne.s32.totalorder %s90, %s91
    %p103 = scmp.eq.s32.totalorder %s18, 1
    %p104 = por %p102, %p103
    %p106 = scmp.ne.s32.totalorder %s91, %s105
    %p107 = scmp.eq.s32.totalorder %s18, 0
    %p108 = por %p106, %p107
    %s110 = sadd.s32 %s109, 1
    %p113 = scmp.eq.s32.totalorder %s12, 1
    %p114 = scmp.ne.s32.totalorder %s109, %s111
    %p115 = scmp.eq.s32.totalorder %s12, 0
    %p116 = por %p114, %p115
    %p117 = scmp.ne.s32.totalorder %s109, %s111
    %p118 = scmp.eq.s32.totalorder %s17, 1
    %p119 = por %p117, %p118
    %p120 = scmp.ne.s32.totalorder %s111, %s112
    %p121 = scmp.eq.s32.totalorder %s17, 0
    %p122 = por %p120, %p121
    %p123 = scmp.ne.s32.totalorder %s111, %s112
    %p124 = scmp.eq.s32.totalorder %s18, 1
    %p125 = por %p123, %p124
    %p127 = scmp.ne.s32.totalorder %s112, %s126
    %p128 = scmp.eq.s32.totalorder %s18, 0
    %p129 = por %p127, %p128
    %s131 = sadd.s32 %s130, 1
    %p134 = scmp.eq.s32.totalorder %s12, 1
    %p135 = scmp.ne.s32.totalorder %s130, %s132
    %p136 = scmp.eq.s32.totalorder %s12, 0
    %p137 = por %p135, %p136
    %p138 = scmp.ne.s32.totalorder %s130, %s132
    %p139 = scmp.eq.s32.totalorder %s17, 1
    %p140 = por %p138, %p139
    %p141 = scmp.ne.s32.totalorder %s132, %s133
    %p142 = scmp.eq.s32.totalorder %s17, 0
    %p143 = por %p141, %p142
    %p144 = scmp.ne.s32.totalorder %s132, %s133
    %p145 = scmp.eq.s32.totalorder %s18, 1
    %p146 = por %p144, %p145
    %p148 = scmp.ne.s32.totalorder %s133, %s147
    %p149 = scmp.eq.s32.totalorder %s18, 0
    %p150 = por %p148, %p149
    %s151 = ssub.s32 %s12, %s19
    %p152 = scmp.eq.s32.totalorder %s151, 0
    %s154 = sadd.s32 %s153, 1
    %s155 = scalar_select %p152, %s153, %s154
    %p158 = pneg %p152
    %p159 = scmp.eq.s32.totalorder %s12, 1
    %p160 = por %p158, %p159
    %p161 = scmp.ne.s32.totalorder %s153, %s156
    %p162 = scmp.eq.s32.totalorder %s12, 0
    %p163 = por %p161, %p162
    %p164 = scmp.ne.s32.totalorder %s153, %s156
    %p165 = scmp.eq.s32.totalorder %s17, 1
    %p166 = por %p164, %p165
    %p167 = scmp.ne.s32.totalorder %s156, %s157
    %p168 = scmp.eq.s32.totalorder %s17, 0
    %p169 = por %p167, %p168
    %p170 = scmp.ne.s32.totalorder %s156, %s157
    %p171 = scmp.eq.s32.totalorder %s18, 1
    %p172 = por %p170, %p171
    %p174 = scmp.ne.s32.totalorder %s157, %s173
    %p175 = scmp.eq.s32.totalorder %s18, 0
    %p176 = por %p174, %p175
    %p177 = scmp.le.s32.totalorder 1, %s12
    %p178 = scmp.lt.s32.totalorder %s12, 3
    %p179 = pnand %p177, %p178
    %p180 = pneg %p179
    // Predicated region
    $region9: #{generator_forward.1} parent=5 // pred_check
      _
    $region10: #{generator_forward.1} parent=5 // pred_check_branch
      %182 = sbr.rel (%p179) target = $region12
    $region11: #{generator_forward.1} parent=5 // pred_region
      %s183 = ssub.s32 %s12, 1
      // Predicated region
      $region13: #{generator_forward.1} parent=11 // pred_check
        %p184 = pneg %p59
      $region14: #{generator_forward.1} parent=11 // pred_check_branch
        %186 = sbr.rel (%p184) target = $region16
      $region15: #{generator_forward.1} parent=11 // pred_region
        _
      $region16: #{generator_forward.1} parent=11 // pred_fallthru
        _
      // Predicated region
      $region17: #{generator_forward.1} parent=11 // pred_check
        %p187 = pneg %p80
      $region18: #{generator_forward.1} parent=11 // pred_check_branch
        %189 = sbr.rel (%p187) target = $region20
      $region19: #{generator_forward.1} parent=11 // pred_region
        _
      $region20: #{generator_forward.1} parent=11 // pred_fallthru
        _
      // Predicated region
      $region21: #{generator_forward.1} parent=11 // pred_check
        %p190 = pneg %p101
      $region22: #{generator_forward.1} parent=11 // pred_check_branch
        %192 = sbr.rel (%p190) target = $region24
      $region23: #{generator_forward.1} parent=11 // pred_region
        _
      $region24: #{generator_forward.1} parent=11 // pred_fallthru
        _
      // Predicated region
      $region25: #{generator_forward.1} parent=11 // pred_check
        %p193 = pneg %p122
      $region26: #{generator_forward.1} parent=11 // pred_check_branch
        %195 = sbr.rel (%p193) target = $region28
      $region27: #{generator_forward.1} parent=11 // pred_region
        _
      $region28: #{generator_forward.1} parent=11 // pred_fallthru
        _
      // Predicated region
      $region29: #{generator_forward.1} parent=11 // pred_check
        %p196 = pneg %p143
      $region30: #{generator_forward.1} parent=11 // pred_check_branch
        %198 = sbr.rel (%p196) target = $region32
      $region31: #{generator_forward.1} parent=11 // pred_region
        _
      $region32: #{generator_forward.1} parent=11 // pred_fallthru
        _
    $region12: #{generator_forward.1} parent=5 // pred_fallthru
      _
    %p199 = scmp.lt.s32.totalorder %s12, 2
    // Predicated region
    $region33: #{generator_forward.1} parent=5 // pred_check
      %p200 = pneg %p199
    $region34: #{generator_forward.1} parent=5 // pred_check_branch
      %202 = sbr.rel (%p200) target = $region36
    $region35: #{generator_forward.1} parent=5 // pred_region
      // Predicated region
      $region37: #{generator_forward.1} parent=35 // pred_check
        %p203 = pneg %p32
      $region38: #{generator_forward.1} parent=35 // pred_check_branch
        %205 = sbr.rel (%p203) target = $region40
      $region39: #{generator_forward.1} parent=35 // pred_region
        %p206 = scmp.lt.s32.totalorder %s12, 1
        %s207 = scalar_select %p206, %s12, 1
        %s208 = smul.addr %s207, 15
        %s209 = smul.addr %s208, 8
        %s210 = scalar_lea.vmem %s0, %s209
      $region40: #{generator_forward.1} parent=35 // pred_fallthru
        _
    $region36: #{generator_forward.1} parent=5 // pred_fallthru
      _
    %p211 = scmp.le.s32.totalorder 1, %s12
    %p212 = scmp.lt.s32.totalorder %s12, 3
    %p213 = pnand %p211, %p212
    %p214 = pneg %p213
    // Predicated region
    $region41: #{generator_forward.1} parent=5 // pred_check
      _
    $region42: #{generator_forward.1} parent=5 // pred_check_branch
      %216 = sbr.rel (%p213) target = $region44
    $region43: #{generator_forward.1} parent=5 // pred_region
      %s217 = ssub.s32 %s12, 1
      %p218 = scmp.lt.s32.totalorder %s17, 1
      %s219 = scalar_select %p218, %s17, 1
      %s220 = smul.addr %s219, 15
      %s221 = smul.addr %s220, 8
      %s222 = scalar_lea.vmem %s0, %s221
      %p223 = pneg %p38
      %p224 = pneg %p35
      %p225 = pneg %p59
      %p226 = pneg %p56
      %p227 = pneg %p80
      %p228 = pneg %p77
      %p229 = pneg %p101
      %p230 = pneg %p98
      %p231 = pneg %p122
      %p232 = pneg %p119
      %p233 = pneg %p143
      %p234 = pneg %p140
      %p235 = pneg %p169
      %p236 = pneg %p166
      %p237 = scmp.lt.s32.totalorder %s17, 1
      %s238 = scalar_select %p237, %s17, 1
      %s239 = smul.addr %s238, 3
      %s240 = smul.addr %s239, 4
      %s241 = scalar_lea.vmem %s6, %s240
      %p242 = scmp.lt.s32.totalorder %s17, 1
      %s243 = scalar_select %p242, %s17, 1
      %s244 = smul.addr %s243, 15
      %s245 = smul.addr %s244, 8
      %s246 = scalar_lea.vmem %s0, %s245
      %p247 = scmp.lt.s32.totalorder %s17, 1
      %s248 = scalar_select %p247, %s17, 1
      %s249 = smul.addr %s248, 3
      %s250 = smul.addr %s249, 4
      %s251 = scalar_lea.vmem %s6, %s250
      %v252 = vld [vmem:[%s2] sm:$0xff]
      %v253 = vld [vmem:[%s246] sm:$0xff]
      %v254 = vld [vmem:[%s246 + $0x8] sm:$0xff]
      %v255 = vld [vmem:[%s246 + $0x10] sm:$0xff]
      %v256 = vld [vmem:[%s246 + $0x18] sm:$0xff]
      %v257 = vld [vmem:[%s246 + $0x20] sm:$0xff]
      %v258 = vld [vmem:[%s246 + $0x28] sm:$0xff]
      %v259 = vld [vmem:[%s246 + $0x30] sm:$0xff]
      %v260 = vld [vmem:[%s246 + $0x38] sm:$0xff]
      %v261 = vld [vmem:[%s246 + $0x40] sm:$0xff]
      %v262 = vld [vmem:[%s246 + $0x48] sm:$0xff]
      %v263 = vld [vmem:[%s246 + $0x50] sm:$0xff]
      %v264 = vld [vmem:[%s246 + $0x58] sm:$0xff]
      %v265 = vld [vmem:[%s246 + $0x60] sm:$0xf]
      %v266 = vld [vmem:[%s246 + $0x68] sm:$0xf]
      %v267 = vld [vmem:[%s246 + $0x70] sm:$0xf]
      %v268 = vld [vmem:[%s3] sm:$0xff]
      %270 = vset.pattern.permute.xlu0 0
      %271 = vperm.xlu0 %270, %v268
      %v272 = vpop.permute.xlu0 %271
      %vm274 = vcmask 293888
      %v276 = vsel %vm274, %v252, 0
      %vm278 = vcmask 1043456
      %v280 = vsel %vm278, %v265, 0
      %v283 = vsel %vm278, %v266, 0
      %v286 = vsel %vm278, %v267, 0
      %288 = vmatprep.subr.mxu0 %v254
      %289 = vmatpush1.msra.mxu0 %v253
      %290 = vmatprep.subr.mxu0 %v257
      %291 = vmatpush1.msra.mxu0 %v256
      %292 = vmatprep.subr.mxu0 %v260
      %293 = vmatpush1.msra.mxu0 %v259
      %294 = vmatprep.subr.mxu0 %v263
      %295 = vmatpush1.msra.mxu0 %v262
      %296 = vmatprep.subr.mxu0 %v283
      %297 = vmatpush1.msra.mxu0 %v280
      %298 = vmatprep.subr.mxu0 0.0
      %299 = vmatpush1.msra.mxu0 0.0
      %300 = vmatprep.subr.mxu0 0.0
      %301 = vmatpush1.msra.mxu0 0.0
      %302 = vmatprep.subr.mxu0 0.0
      %303 = vmatpush1.msra.mxu0 0.0
      %304 = vmatprep.subr.mxu0 0.0
      %305 = vmatpush1.msra.mxu0 0.0
      %306 = vmatprep.subr.mxu0 0.0
      %307 = vmatpush1.msra.mxu0 0.0
      %308 = vmatprep.subr.mxu0 0.0
      %309 = vmatpush1.msra.mxu0 0.0
      %310 = vmatprep.subr.mxu0 0.0
      %311 = vmatpush1.msra.mxu0 0.0
      %312 = vmatprep.subr.mxu0 0.0
      %313 = vmatpush1.msra.mxu0 0.0
      %314 = vmatprep.subr.mxu0 0.0
      %315 = vmatpush1.msra.mxu0 0.0
      %316 = vmatprep.subr.mxu0 0.0
      %317 = vmatpush1.msra.mxu0 0.0
      %318 = vmatprep.subr.mxu0 0.0
      %319 = vmatpush1.msra.mxu0 0.0
      %320 = vmatprep.subr.mxu0 0.0
      %321 = vmatpush1.msra.mxu0 0.0
      %322 = vmatprep.subr.mxu0 0.0
      %323 = vmatpush1.msra.mxu0 0.0
      %324 = vmatprep.subr.mxu0 0.0
      %325 = vmatpush1.msra.mxu0 0.0
      %326 = vmatprep.subr.mxu0 0.0
      %327 = vmatpush1.msra.mxu0 0.0
      %328 = vmatprep.subr.mxu0 0.0
      %329 = vmatpush1.msra.mxu0 0.0
      %330 = vmatprep.subr.mxu0 0.0
      %331 = vmatpush1.msra.mxu0 0.0
      %332 = vmatprep.subr.mxu0 0.0
      %333 = vmatpush1.msra.mxu0 0.0
      %334 = vmatprep.subr.mxu0 0.0
      %335 = vmatpush1.msra.mxu0 0.0
      %336 = vmatprep.subr.mxu0 0.0
      %337 = vmatpush1.msra.mxu0 0.0
      %338 = vmatprep.subr.mxu0 0.0
      %339 = vmatpush1.msra.mxu0 0.0
      %340 = vmatprep.subr.mxu0 0.0
      %341 = vmatpush1.msra.mxu0 0.0
      %342 = vmatprep.subr.mxu0 0.0
      %343 = vmatpush1.msra.mxu0 0.0
      %344 = vmatprep.subr.mxu0 0.0
      %345 = vmatpush1.msra.mxu0 0.0
      %346 = vmatprep.subr.mxu0 0.0
      %347 = vmatpush1.msra.mxu0 0.0
      %348 = vmatprep.subr.mxu0 0.0
      %349 = vmatpush1.msra.mxu0 0.0
      %350 = vmatprep.subr.mxu0 0.0
      %351 = vmatpush1.msra.mxu0 0.0
      %352 = vmatprep.mubr.f32.mxu0 0.0
      %353 = vmatmul.mubr.f32.gmra.mrb[0].mxu0 %v276
      %v354 = vpop.f32.mrb[0].mxu0
      %v355 = vadd.f32 %v272, %v354
      %v356 = vpop.f32.mrb[0].mxu0
      %v357 = vadd.f32 %v272, %v356
      %358 = vdwg.mxu0
      %359 = vmatprep.subr.mxu0 0.0
      %360 = vmatpush1.msra.mxu0 %v255
      %361 = vmatprep.subr.mxu0 0.0
      %362 = vmatpush1.msra.mxu0 %v258
      %363 = vmatprep.subr.mxu0 0.0
      %364 = vmatpush1.msra.mxu0 %v261
      %365 = vmatprep.subr.mxu0 0.0
      %366 = vmatpush1.msra.mxu0 %v264
      %367 = vmatprep.subr.mxu0 0.0
      %368 = vmatpush1.msra.mxu0 %v286
      %369 = vmatprep.subr.mxu0 0.0
      %370 = vmatpush1.msra.mxu0 0.0
      %371 = vmatprep.subr.mxu0 0.0
      %372 = vmatpush1.msra.mxu0 0.0
      %373 = vmatprep.subr.mxu0 0.0
      %374 = vmatpush1.msra.mxu0 0.0
      %375 = vmatprep.subr.mxu0 0.0
      %376 = vmatpush1.msra.mxu0 0.0
      %377 = vmatprep.subr.mxu0 0.0
      %378 = vmatpush1.msra.mxu0 0.0
      %379 = vmatprep.subr.mxu0 0.0
      %380 = vmatpush1.msra.mxu0 0.0
      %381 = vmatprep.subr.mxu0 0.0
      %382 = vmatpush1.msra.mxu0 0.0
      %383 = vmatprep.subr.mxu0 0.0
      %384 = vmatpush1.msra.mxu0 0.0
      %385 = vmatprep.subr.mxu0 0.0
      %386 = vmatpush1.msra.mxu0 0.0
      %387 = vmatprep.subr.mxu0 0.0
      %388 = vmatpush1.msra.mxu0 0.0
      %389 = vmatprep.subr.mxu0 0.0
      %390 = vmatpush1.msra.mxu0 0.0
      %391 = vmatprep.subr.mxu0 0.0
      %392 = vmatpush1.msra.mxu0 0.0
      %393 = vmatprep.subr.mxu0 0.0
      %394 = vmatpush1.msra.mxu0 0.0
      %395 = vmatprep.subr.mxu0 0.0
      %396 = vmatpush1.msra.mxu0 0.0
      %397 = vmatprep.subr.mxu0 0.0
      %398 = vmatpush1.msra.mxu0 0.0
      %399 = vmatprep.subr.mxu0 0.0
      %400 = vmatpush1.msra.mxu0 0.0
      %401 = vmatprep.subr.mxu0 0.0
      %402 = vmatpush1.msra.mxu0 0.0
      %403 = vmatprep.subr.mxu0 0.0
      %404 = vmatpush1.msra.mxu0 0.0
      %405 = vmatprep.subr.mxu0 0.0
      %406 = vmatpush1.msra.mxu0 0.0
      %407 = vmatprep.subr.mxu0 0.0
      %408 = vmatpush1.msra.mxu0 0.0
      %409 = vmatprep.subr.mxu0 0.0
      %410 = vmatpush1.msra.mxu0 0.0
      %411 = vmatprep.subr.mxu0 0.0
      %412 = vmatpush1.msra.mxu0 0.0
      %413 = vmatprep.subr.mxu0 0.0
      %414 = vmatpush1.msra.mxu0 0.0
      %415 = vmatprep.subr.mxu0 0.0
      %416 = vmatpush1.msra.mxu0 0.0
      %417 = vmatprep.subr.mxu0 0.0
      %418 = vmatpush1.msra.mxu0 0.0
      %419 = vmatprep.subr.mxu0 0.0
      %420 = vmatpush1.msra.mxu0 0.0
      %421 = vmatprep.subr.mxu0 0.0
      %422 = vmatpush1.msra.mxu0 0.0
      %423 = vmatprep.mubr.f32.mxu0 0.0
      %424 = vmatmul.mubr.f32.gmra.mrb[0].mxu0 %v276
      %v425 = vpop.f32.mrb[0].mxu0
      %v426 = vadd.f32 %v272, %v425
      %v427 = vpop.f32.mrb[0].mxu0
      %428 = vdwg.mxu0
      %v429 = vmax.f32 %v355, 0.0
      %v430 = vmax.f32 %v357, 0.0
      %v431 = vmax.f32 %v426, 0.0
      %v432 = vld [vmem:[%s1] sm:$0x7]
      %v434 = vlaneseq
      %v435 = vshrl.u32 %v434, 7
      %v436 = vsub.s32 0, %v435
      %v437 = vrot.slane %v432, %v436
      %v438 = vlaneseq
      %v439 = vshrl.u32 %v438, 7
      %v440 = vsub.s32 1, %v439
      %v441 = vrot.slane %v432, %v440
      %v442 = vlaneseq
      %v443 = vshrl.u32 %v442, 7
      %v444 = vsub.s32 2, %v443
      %v445 = vrot.slane %v432, %v444
      %v449 = vmul.f32 %v429, %v437
      %v450 = vmul.f32 %v430, %v441
      %v451 = vmul.f32 %v431, %v445
      %455 = vrot.lane.b32.xlu0 %v449, 19
      %v456 = vpop.permute.xlu0 %455
      %457 = vrot.lane.b32.xlu0 %v450, 19
      %v458 = vpop.permute.xlu0 %457
      %459 = vrot.lane.b32.xlu0 %v451, 19
      %v460 = vpop.permute.xlu0 %459
      %vm461 = vcmask 154624
      %v462 = vsel %vm461, %v456, %v458
      %v463 = vsel %vm461, %v458, %v460
      %v467 = vsel %vm461, 0.0, %v456
      %vm468 = vcmask 711680
      %v469 = vsel %vm468, %v463, 0.0
      %472 = vrot.lane.b32.xlu0 %v467, 127
      %v473 = vpop.permute.xlu0 %472
      %474 = vrot.lane.b32.xlu0 %v462, 127
      %v475 = vpop.permute.xlu0 %474
      %476 = vrot.lane.b32.xlu0 %v469, 127
      %v477 = vpop.permute.xlu0 %476
      %vm478 = vcmask 1039360
      %v479 = vsel %vm478, %v473, %v475
      %v480 = vsel %vm478, %v475, %v477
      %484 = vrot.lane.b32.xlu0 %v467, 126
      %v485 = vpop.permute.xlu0 %484
      %486 = vrot.lane.b32.xlu0 %v462, 126
      %v487 = vpop.permute.xlu0 %486
      %488 = vrot.lane.b32.xlu0 %v469, 126
      %v489 = vpop.permute.xlu0 %488
      %vm490 = vcmask 1031168
      %v491 = vsel %vm490, %v485, %v487
      %v492 = vsel %vm490, %v487, %v489
      %496 = vrot.lane.b32.xlu0 %v467, 110
      %v497 = vpop.permute.xlu0 %496
      %498 = vrot.lane.b32.xlu0 %v462, 110
      %v499 = vpop.permute.xlu0 %498
      %500 = vrot.lane.b32.xlu0 %v469, 110
      %v501 = vpop.permute.xlu0 %500
      %vm502 = vcmask 900096
      %v503 = vsel %vm502, %v497, %v499
      %v504 = vsel %vm502, %v499, %v501
      %508 = vrot.lane.b32.xlu0 %v467, 109
      %v509 = vpop.permute.xlu0 %508
      %510 = vrot.lane.b32.xlu0 %v462, 109
      %v511 = vpop.permute.xlu0 %510
      %512 = vrot.lane.b32.xlu0 %v469, 109
      %v513 = vpop.permute.xlu0 %512
      %vm514 = vcmask 891904
      %v515 = vsel %vm514, %v509, %v511
      %v516 = vsel %vm514, %v511, %v513
      %520 = vrot.lane.b32.xlu0 %v467, 108
      %v521 = vpop.permute.xlu0 %520
      %522 = vrot.lane.b32.xlu0 %v462, 108
      %v523 = vpop.permute.xlu0 %522
      %524 = vrot.lane.b32.xlu0 %v469, 108
      %v525 = vpop.permute.xlu0 %524
      %vm526 = vcmask 883712
      %v527 = vsel %vm526, %v521, %v523
      %v528 = vsel %vm526, %v523, %v525
      %532 = vrot.lane.b32.xlu0 %v467, 92
      %v533 = vpop.permute.xlu0 %532
      %534 = vrot.lane.b32.xlu0 %v462, 92
      %v535 = vpop.permute.xlu0 %534
      %536 = vrot.lane.b32.xlu0 %v469, 92
      %v537 = vpop.permute.xlu0 %536
      %vm538 = vcmask 752640
      %v539 = vsel %vm538, %v533, %v535
      %v540 = vsel %vm538, %v535, %v537
      %544 = vrot.lane.b32.xlu0 %v467, 91
      %v545 = vpop.permute.xlu0 %544
      %546 = vrot.lane.b32.xlu0 %v462, 91
      %v547 = vpop.permute.xlu0 %546
      %548 = vrot.lane.b32.xlu0 %v469, 91
      %v549 = vpop.permute.xlu0 %548
      %vm550 = vcmask 744448
      %v551 = vsel %vm550, %v545, %v547
      %v552 = vsel %vm550, %v547, %v549
      %556 = vrot.lane.b32.xlu0 %v467, 90
      %v557 = vpop.permute.xlu0 %556
      %558 = vrot.lane.b32.xlu0 %v462, 90
      %v559 = vpop.permute.xlu0 %558
      %560 = vrot.lane.b32.xlu0 %v469, 90
      %v561 = vpop.permute.xlu0 %560
      %vm562 = vcmask 736256
      %v563 = vsel %vm562, %v557, %v559
      %v564 = vsel %vm562, %v559, %v561
      %v568 = vld [vmem:[%s4] sm:$0x7]
      %v569 = vld [vmem:[%s5] sm:$0x7]
      %571 = vset.pattern.permute.xlu0 0
      %572 = vperm.xlu0 %571, %v569
      %v573 = vpop.permute.xlu0 %572
      %vm575 = vcmask 588800
      %v577 = vsel %vm575, %v568, 0
      %579 = vmatprep.subr.mxu0 %v462
      %580 = vmatpush1.msra.mxu0 %v467
      %581 = vmatprep.subr.mxu0 %v480
      %582 = vmatpush1.msra.mxu0 %v479
      %583 = vmatprep.subr.mxu0 %v492
      %584 = vmatpush1.msra.mxu0 %v491
      %585 = vmatprep.subr.mxu0 %v504
      %586 = vmatpush1.msra.mxu0 %v503
      %587 = vmatprep.subr.mxu0 %v516
      %588 = vmatpush1.msra.mxu0 %v515
      %589 = vmatprep.subr.mxu0 %v528
      %590 = vmatpush1.msra.mxu0 %v527
      %591 = vmatprep.subr.mxu0 %v540
      %592 = vmatpush1.msra.mxu0 %v539
      %593 = vmatprep.subr.mxu0 %v552
      %594 = vmatpush1.msra.mxu0 %v551
      %595 = vmatprep.subr.mxu0 %v564
      %596 = vmatpush1.msra.mxu0 %v563
      %597 = vmatprep.subr.mxu0 0.0
      %598 = vmatpush1.msra.mxu0 0.0
      %599 = vmatprep.subr.mxu0 0.0
      %600 = vmatpush1.msra.mxu0 0.0
      %601 = vmatprep.subr.mxu0 0.0
      %602 = vmatpush1.msra.mxu0 0.0
      %603 = vmatprep.subr.mxu0 0.0
      %604 = vmatpush1.msra.mxu0 0.0
      %605 = vmatprep.subr.mxu0 0.0
      %606 = vmatpush1.msra.mxu0 0.0
      %607 = vmatprep.subr.mxu0 0.0
      %608 = vmatpush1.msra.mxu0 0.0
      %609 = vmatprep.subr.mxu0 0.0
      %610 = vmatpush1.msra.mxu0 0.0
      %611 = vmatprep.subr.mxu0 0.0
      %612 = vmatpush1.msra.mxu0 0.0
      %613 = vmatprep.subr.mxu0 0.0
      %614 = vmatpush1.msra.mxu0 0.0
      %615 = vmatprep.subr.mxu0 0.0
      %616 = vmatpush1.msra.mxu0 0.0
      %617 = vmatprep.subr.mxu0 0.0
      %618 = vmatpush1.msra.mxu0 0.0
      %619 = vmatprep.subr.mxu0 0.0
      %620 = vmatpush1.msra.mxu0 0.0
      %621 = vmatprep.subr.mxu0 0.0
      %622 = vmatpush1.msra.mxu0 0.0
      %623 = vmatprep.subr.mxu0 0.0
      %624 = vmatpush1.msra.mxu0 0.0
      %625 = vmatprep.subr.mxu0 0.0
      %626 = vmatpush1.msra.mxu0 0.0
      %627 = vmatprep.subr.mxu0 0.0
      %628 = vmatpush1.msra.mxu0 0.0
      %629 = vmatprep.subr.mxu0 0.0
      %630 = vmatpush1.msra.mxu0 0.0
      %631 = vmatprep.subr.mxu0 0.0
      %632 = vmatpush1.msra.mxu0 0.0
      %633 = vmatprep.subr.mxu0 0.0
      %634 = vmatpush1.msra.mxu0 0.0
      %635 = vmatprep.subr.mxu0 0.0
      %636 = vmatpush1.msra.mxu0 0.0
      %637 = vmatprep.subr.mxu0 0.0
      %638 = vmatpush1.msra.mxu0 0.0
      %639 = vmatprep.subr.mxu0 0.0
      %640 = vmatpush1.msra.mxu0 0.0
      %641 = vmatprep.subr.mxu0 0.0
      %642 = vmatpush1.msra.mxu0 0.0
      %643 = vmatprep.mubr.f32.mxu0 0.0
      %644 = vmatmul.mubr.f32.gmra.mrb[0].mxu0 %v577
      %v645 = vpop.f32.mrb[0].mxu0
      %v646 = vadd.f32 %v573, %v645
      %v647 = vpop.f32.mrb[0].mxu0
      %v648 = vadd.f32 %v573, %v647
      %649 = vdwg.mxu0
      %650 = vmatprep.subr.mxu0 0.0
      %651 = vmatpush1.msra.mxu0 %v469
      %652 = vmatprep.subr.mxu0 0.0
      %653 = vmatpush1.msra.mxu0 %v477
      %654 = vmatprep.subr.mxu0 0.0
      %655 = vmatpush1.msra.mxu0 %v489
      %656 = vmatprep.subr.mxu0 0.0
      %657 = vmatpush1.msra.mxu0 %v501
      %658 = vmatprep.subr.mxu0 0.0
      %659 = vmatpush1.msra.mxu0 %v513
      %660 = vmatprep.subr.mxu0 0.0
      %661 = vmatpush1.msra.mxu0 %v525
      %662 = vmatprep.subr.mxu0 0.0
      %663 = vmatpush1.msra.mxu0 %v537
      %664 = vmatprep.subr.mxu0 0.0
      %665 = vmatpush1.msra.mxu0 %v549
      %666 = vmatprep.subr.mxu0 0.0
      %667 = vmatpush1.msra.mxu0 %v561
      %668 = vmatprep.subr.mxu0 0.0
      %669 = vmatpush1.msra.mxu0 0.0
      %670 = vmatprep.subr.mxu0 0.0
      %671 = vmatpush1.msra.mxu0 0.0
      %672 = vmatprep.subr.mxu0 0.0
      %673 = vmatpush1.msra.mxu0 0.0
      %674 = vmatprep.subr.mxu0 0.0
      %675 = vmatpush1.msra.mxu0 0.0
      %676 = vmatprep.subr.mxu0 0.0
      %677 = vmatpush1.msra.mxu0 0.0
      %678 = vmatprep.subr.mxu0 0.0
      %679 = vmatpush1.msra.mxu0 0.0
      %680 = vmatprep.subr.mxu0 0.0
      %681 = vmatpush1.msra.mxu0 0.0
      %682 = vmatprep.subr.mxu0 0.0
      %683 = vmatpush1.msra.mxu0 0.0
      %684 = vmatprep.subr.mxu0 0.0
      %685 = vmatpush1.msra.mxu0 0.0
      %686 = vmatprep.subr.mxu0 0.0
      %687 = vmatpush1.msra.mxu0 0.0
      %688 = vmatprep.subr.mxu0 0.0
      %689 = vmatpush1.msra.mxu0 0.0
      %690 = vmatprep.subr.mxu0 0.0
      %691 = vmatpush1.msra.mxu0 0.0
      %692 = vmatprep.subr.mxu0 0.0
      %693 = vmatpush1.msra.mxu0 0.0
      %694 = vmatprep.subr.mxu0 0.0
      %695 = vmatpush1.msra.mxu0 0.0
      %696 = vmatprep.subr.mxu0 0.0
      %697 = vmatpush1.msra.mxu0 0.0
      %698 = vmatprep.subr.mxu0 0.0
      %699 = vmatpush1.msra.mxu0 0.0
      %700 = vmatprep.subr.mxu0 0.0
      %701 = vmatpush1.msra.mxu0 0.0
      %702 = vmatprep.subr.mxu0 0.0
      %703 = vmatpush1.msra.mxu0 0.0
      %704 = vmatprep.subr.mxu0 0.0
      %705 = vmatpush1.msra.mxu0 0.0
      %706 = vmatprep.subr.mxu0 0.0
      %707 = vmatpush1.msra.mxu0 0.0
      %708 = vmatprep.subr.mxu0 0.0
      %709 = vmatpush1.msra.mxu0 0.0
      %710 = vmatprep.subr.mxu0 0.0
      %711 = vmatpush1.msra.mxu0 0.0
      %712 = vmatprep.subr.mxu0 0.0
      %713 = vmatpush1.msra.mxu0 0.0
      %714 = vmatprep.mubr.f32.mxu0 0.0
      %715 = vmatmul.mubr.f32.gmra.mrb[0].mxu0 %v577
      %v716 = vpop.f32.mrb[0].mxu0
      %v717 = vadd.f32 %v573, %v716
      %v718 = vpop.f32.mrb[0].mxu0
      %719 = vdwg.mxu0
      %v720 = vtanh.pop %v646
      %v721 = vtanh.pop %v648
      %v722 = vtanh.pop %v717
      %v725 = vcombine.low %v720, %v721
      %727 = vst [vmem:[%s251] sm:$0x77] %v725
      %vm728 = vcmask 550912
      %729 = vst.msk [vmem:[%s251 + $0x8] sm:$0x7] %vm728, %v722
      %p730 = scmp.lt.s32.totalorder %s17, 1
      %s731 = scalar_select %p730, %s17, 1
      %s732 = smul.addr %s731, 3
      %s733 = smul.addr %s732, 4
      %s734 = scalar_lea.vmem %s6, %s733
      // Predicated region
      $region45: #{generator_forward.1} parent=43 // pred_check
        %p735 = pneg %p166
      $region46: #{generator_forward.1} parent=43 // pred_check_branch
        %737 = sbr.rel (%p735) target = $region48
      $region47: #{generator_forward.1} parent=43 // pred_region
        _
      $region48: #{generator_forward.1} parent=43 // pred_fallthru
        _
    $region44: #{generator_forward.1} parent=5 // pred_fallthru
      _
    %p738 = scmp.le.s32.totalorder 2, %s12
    // Predicated region
    $region49: #{generator_forward.1} parent=5 // pred_check
      %p739 = pneg %p738
    $region50: #{generator_forward.1} parent=5 // pred_check_branch
      %741 = sbr.rel (%p739) target = $region52
    $region51: #{generator_forward.1} parent=5 // pred_region
      %s742 = ssub.s32 %s12, 2
      // Predicated region
      $region53: #{generator_forward.1} parent=51 // pred_check
        %p743 = pneg %p172
      $region54: #{generator_forward.1} parent=51 // pred_check_branch
        %745 = sbr.rel (%p743) target = $region56
      $region55: #{generator_forward.1} parent=51 // pred_region
        %p746 = scmp.lt.s32.totalorder %s18, 1
        %s747 = scalar_select %p746, %s18, 1
        %s748 = smul.addr %s747, 3
        %s749 = smul.addr %s748, 4
        %s750 = scalar_lea.vmem %s6, %s749
      $region56: #{generator_forward.1} parent=51 // pred_fallthru
        _
    $region52: #{generator_forward.1} parent=5 // pred_fallthru
      _
  $region6: #{generator_forward.1} parent=0 // loop_footer
    %s16 = sadd.s32 1, %s12
  $region7: #{generator_forward.1} parent=0 // loop_footer_branch
    %11 = sbr.rel target = $region3
  $region8: #{generator_forward.1} parent=0 // loop_exit
    _

</llo_original>
